<compile_context>
chip_gen: v7x
topology: tpu7x:2x2x1
jax: 0.10.0
libtpu: 0.0.40
codegen_flags: <defaults>
</compile_context>

<pallas_src>
import functools
import math

import jax
import jax.numpy as jnp
from jax.experimental import pallas as pl
from jax.experimental.pallas import tpu as pltpu


def _cos_margin_kernel(x_ref, w_ref, tgt_ref, o_ref, *, s, m, tile_c):
    x = x_ref[...]                                  # (B, E)      f32 or bf16
    w = w_ref[...]                                  # (TILE_C, E) f32 or bf16
    b, emb = x.shape

    contract_on_e = (((1,), (1,)), ((), ()))

    # cosine numerator on the MXU: contract x and w on the emb axis
    # (raw weight, no .T, no normalized copy of the weight tile).
    dots = jax.lax.dot_general(
        x, w, contract_on_e,
        preferred_element_type=jnp.float32)         # (B, TILE_C) f32

    # Per-class ||w||^2, produced directly in (B, TILE_C) layout via a
    # ones-LHS MXU pass (same dot pattern as above; negligible vs. the
    # weight-tile DMA, avoids any cross-layout relayout of a row reduction).
    w32 = w.astype(jnp.float32)
    sumsq = jax.lax.dot_general(
        jnp.ones((b, emb), jnp.float32), w32 * w32, contract_on_e,
        preferred_element_type=jnp.float32)         # (B, TILE_C)

    # Inverse row norm on the EUP.  max(sumsq, 1e-24) == torch F.normalize's
    # max(norm, 1e-12) clamp and keeps zero padding rows finite.
    inv = jax.lax.rsqrt(jnp.maximum(sumsq, 1e-24))
    cosine = dots * inv
    cosine = jnp.clip(cosine, -1.0 + 1e-07, 1.0 - 1e-07)

    # CosFace margin: subtract m only on the target class column, scale by s.
    tgt = tgt_ref[...].astype(jnp.int32)            # (B, 1)
    col = jax.lax.broadcasted_iota(jnp.int32, cosine.shape, 1)
    col = col + pl.program_id(0) * tile_c           # global class index
    out = jnp.where(col == tgt, cosine - m, cosine) * s
    o_ref[...] = out.astype(o_ref.dtype)


def cos_margin_product(x, weight, targets, *, m=0.35, tile_c=256,
                       use_bf16=False):
    """x: (B, E), weight: (C, E), targets: (B,) int -> (B, C) f32 logits."""
    B, E = x.shape
    C, E2 = weight.shape
    assert E == E2 and C >= 2
    # NOTE: the PyTorch module overrides the user-supplied s in __init__:
    s = math.sqrt(2.0) * math.log(C - 1)

    # Pad C up to a multiple of 128 (lane-dense output stores), then make the
    # padded extent divisible by the class tile.
    c_pad = ((C + 127) // 128) * 128
    tile_c = max(128, min((tile_c // 128) * 128, c_pad))
    c_pad = ((c_pad + tile_c - 1) // tile_c) * tile_c
    if c_pad > C:
        weight = jnp.pad(weight, ((0, c_pad - C), (0, 0)))

    in_dtype = jnp.bfloat16 if use_bf16 else jnp.float32
    x_in = x.astype(in_dtype)
    w_in = weight.astype(in_dtype)
    tgt2d = targets.reshape(B, 1).astype(jnp.int32)

    kernel = functools.partial(_cos_margin_kernel, s=s, m=m, tile_c=tile_c)

    out = pl.pallas_call(
        kernel,
        out_shape=jax.ShapeDtypeStruct((B, c_pad), jnp.float32),
        grid=(c_pad // tile_c,),
        in_specs=[
            pl.BlockSpec((B, E), lambda j: (0, 0)),        # x: resident
            pl.BlockSpec((tile_c, E), lambda j: (j, 0)),   # weight: streamed
            pl.BlockSpec((B, 1), lambda j: (0, 0)),        # targets: resident
        ],
        out_specs=pl.BlockSpec((B, tile_c), lambda j: (0, j)),
        compiler_params=pltpu.CompilerParams(
            dimension_semantics=("parallel",)),            # both TCs on v7x
    )(x_in, w_in, tgt2d)

    return out[:, :C]


def _reference(x, weight, targets, *, m=0.35):
    """Pure-JAX reference mirroring the PyTorch forward."""
    C = weight.shape[0]
    s = math.sqrt(2.0) * math.log(C - 1)
    norm = jnp.sqrt(jnp.sum(weight * weight, axis=1, keepdims=True))
    w_n = weight / jnp.maximum(norm, 1e-12)
    cosine = jnp.clip(x @ w_n.T, -1.0 + 1e-07, 1.0 - 1e-07)
    phi = cosine - m
    one_hot = jax.nn.one_hot(targets, C, dtype=jnp.float32)
    return (one_hot * phi + (1.0 - one_hot) * cosine) * s


if __name__ == "__main__":
    key = jax.random.PRNGKey(0)
    kx, kw, kt = jax.random.split(key, 3)

    # 1) Module-default shapes: emb_size=128, out_feature=100.
    B, E, C = 8, 128, 100
    x = jax.random.normal(kx, (B, E), dtype=jnp.float32)
    std = math.sqrt(2.0 / (E + C))                  # xavier_normal_
    w = jax.random.normal(kw, (C, E), dtype=jnp.float32) * std
    tgt = jax.random.randint(kt, (B,), 0, C, dtype=jnp.int32)

    out = jax.block_until_ready(cos_margin_product(x, w, tgt, m=0.35))
    ref = _reference(x, w, tgt, m=0.35)
    assert out.shape == (B, C)
    assert jnp.allclose(out, ref, atol=1e-4, rtol=1e-4), "f32 mismatch (C=100)"

    # 2) Larger class count exercises the tiled weight stream
    #    (C padded 1000 -> 1024, grid of 4 class tiles of 256).
    C2 = 1000
    kw2, kt2 = jax.random.split(kw)
    std2 = math.sqrt(2.0 / (E + C2))
    w2 = jax.random.normal(kw2, (C2, E), dtype=jnp.float32) * std2
    tgt2 = jax.random.randint(kt2, (B,), 0, C2, dtype=jnp.int32)

    out2 = jax.block_until_ready(cos_margin_product(x, w2, tgt2, m=0.35))
    ref2 = _reference(x, w2, tgt2, m=0.35)
    assert out2.shape == (B, C2)
    assert jnp.allclose(out2, ref2, atol=1e-4, rtol=1e-4), "f32 mismatch (C=1000)"

    # 3) bf16 streaming path (halves HBM bytes on the weight, the binding
    #    resource).  Compared against the reference on the same bf16-rounded
    #    inputs; MXU accumulates in f32 so only input rounding differs.
    out3 = jax.block_until_ready(
        cos_margin_product(x, w2, tgt2, m=0.35, use_bf16=True))
    x_b = x.astype(jnp.bfloat16).astype(jnp.float32)
    w_b = w2.astype(jnp.bfloat16).astype(jnp.float32)
    ref3 = _reference(x_b, w_b, tgt2, m=0.35)
    assert jnp.allclose(out3, ref3, atol=2e-3, rtol=2e-3), "bf16 mismatch"

    print("KERNEL_OK")
</pallas_src>

<mosaic_0001>
module attributes {stable_mosaic.version = 11 : i64} {
  func.func @_cos_margin_kernel(%arg0: i32, %arg1: memref<8x128xf32, #tpu.memory_space<vmem>>, %arg2: memref<128x128xf32, #tpu.memory_space<vmem>>, %arg3: memref<8x1xi32, #tpu.memory_space<vmem>>, %arg4: memref<8x128xf32, #tpu.memory_space<vmem>>) attributes {dimension_semantics = [#tpu.dimension_semantics<parallel>], iteration_bounds = array<i64: 1>, scalar_prefetch = 0 : i64, scratch_operands = 0 : i64, tpu.core_type = #tpu.core_type<tc>, window_params = [{pipeline_mode = #tpu.pipeline_mode<synchronous>, transform_indices = @transform_0, window_bounds = array<i64: 8, 128>}, {transform_indices = @transform_1, window_bounds = array<i64: 128, 128>}, {pipeline_mode = #tpu.pipeline_mode<synchronous>, transform_indices = @transform_2, window_bounds = array<i64: 8, 1>}, {transform_indices = @transform_3, window_bounds = array<i64: 8, 128>}]} {
    %c0 = arith.constant 0 : index
    %c0_0 = arith.constant 0 : index
    %0 = vector.load %arg1[%c0, %c0_0] : memref<8x128xf32, #tpu.memory_space<vmem>>, vector<8x128xf32>
    %c0_1 = arith.constant 0 : index
    %c0_2 = arith.constant 0 : index
    %1 = vector.load %arg2[%c0_1, %c0_2] : memref<128x128xf32, #tpu.memory_space<vmem>>, vector<128x128xf32>
    %cst = arith.constant dense<0.000000e+00> : vector<8x128xf32>
    %2 = tpu.matmul %0, %1, %cst {dimension_numbers = #tpu.dot_dimension_numbers<[1], [1], [0], [0], [0, 0, 1, 0], [], []>} : vector<8x128xf32>, vector<128x128xf32>, vector<8x128xf32> -> vector<8x128xf32>
    %cst_3 = arith.constant 1.000000e+00 : f32
    %3 = vector.broadcast %cst_3 : f32 to vector<8x128xf32>
    %4 = arith.mulf %1, %1 : vector<128x128xf32>
    %cst_4 = arith.constant dense<0.000000e+00> : vector<8x128xf32>
    %5 = tpu.matmul %3, %4, %cst_4 {dimension_numbers = #tpu.dot_dimension_numbers<[1], [1], [0], [0], [0, 0, 1, 0], [], []>} : vector<8x128xf32>, vector<128x128xf32>, vector<8x128xf32> -> vector<8x128xf32>
    %cst_5 = arith.constant 1.000000e-24 : f32
    %6 = vector.broadcast %cst_5 : f32 to vector<8x128xf32>
    %7 = arith.maximumf %5, %6 : vector<8x128xf32>
    %8 = math.rsqrt %7 : vector<8x128xf32>
    %9 = arith.mulf %2, %8 : vector<8x128xf32>
    %cst_6 = arith.constant -0.99999988 : f32
    %cst_7 = arith.constant 0.99999988 : f32
    %10 = vector.broadcast %cst_6 : f32 to vector<8x128xf32>
    %11 = arith.maximumf %10, %9 : vector<8x128xf32>
    %12 = vector.broadcast %cst_7 : f32 to vector<8x128xf32>
    %13 = arith.minimumf %12, %11 : vector<8x128xf32>
    %c0_8 = arith.constant 0 : index
    %c0_9 = arith.constant 0 : index
    %14 = vector.load %arg3[%c0_8, %c0_9] : memref<8x1xi32, #tpu.memory_space<vmem>>, vector<8x1xi32>
    %15 = tpu.iota {dimensions = array<i32: 1>} : vector<8x128xi32>
    %c128_i32 = arith.constant 128 : i32
    %16 = arith.muli %arg0, %c128_i32 : i32
    %17 = vector.broadcast %16 : i32 to vector<8x128xi32>
    %18 = arith.addi %15, %17 : vector<8x128xi32>
    %19 = vector.broadcast %14 : vector<8x1xi32> to vector<8x128xi32>
    %20 = arith.cmpi eq, %18, %19 : vector<8x128xi32>
    %cst_10 = arith.constant 3.500000e-01 : f32
    %21 = vector.broadcast %cst_10 : f32 to vector<8x128xf32>
    %22 = arith.subf %13, %21 : vector<8x128xf32>
    %23 = arith.select %20, %22, %13 : vector<8x128xi1>, vector<8x128xf32>
    %cst_11 = arith.constant 6.49848079 : f32
    %24 = vector.broadcast %cst_11 : f32 to vector<8x128xf32>
    %25 = arith.mulf %23, %24 : vector<8x128xf32>
    %c0_12 = arith.constant 0 : index
    %c0_13 = arith.constant 0 : index
    %26 = vector.load %arg4[%c0_12, %c0_13] : memref<8x128xf32, #tpu.memory_space<vmem>>, vector<8x128xf32>
    tpu.vector_store %arg4[%c0_12, %c0_13], %25 {strides = array<i32>} : memref<8x128xf32, #tpu.memory_space<vmem>>, vector<8x128xf32>,
    return
  }
  func.func @transform_0(%arg0: i32) -> (i32, i32) {
    %c0_i32 = arith.constant 0 : i32
    %c0_i32_0 = arith.constant 0 : i32
    %c0_i32_1 = arith.constant 0 : i32
    return %c0_i32, %c0_i32_0 : i32, i32
  }
  func.func @transform_1(%arg0: i32) -> (i32, i32) {
    %c0_i32 = arith.constant 0 : i32
    %c0_i32_0 = arith.constant 0 : i32
    return %arg0, %c0_i32 : i32, i32
  }
  func.func @transform_2(%arg0: i32) -> (i32, i32) {
    %c0_i32 = arith.constant 0 : i32
    %c0_i32_0 = arith.constant 0 : i32
    %c0_i32_1 = arith.constant 0 : i32
    return %c0_i32, %c0_i32_0 : i32, i32
  }
  func.func @transform_3(%arg0: i32) -> (i32, i32) {
    %c0_i32 = arith.constant 0 : i32
    %c0_i32_0 = arith.constant 0 : i32
    return %c0_i32, %arg0 : i32, i32
  }
}

</mosaic_0001>

<llo_original>
// kernel: tpu_custom_call.1
$region0: #{tpu_custom_call.1}
  #allocation0 [shape = 'u32[]', space=smem, size = 0x4, offset = 0x4, fixed_abs, tag = 'smem constant byte address 0x4 - core index']
  #allocation1 [shape = 'u32[144,128]{1,0:T(1,128)}', space=vmem, size = 0x12000, scoped, tag = 'internal scratch']
  %s0 = inlined_call_operand.vmem [shape: f32[8,128], index: 0, kind: input, shape index: {}]
  %s1 = inlined_call_operand.hbm [shape: f32[128,128], index: 1, kind: input, shape index: {}]
  %s2 = inlined_call_operand.vmem [shape: s32[8,1], index: 2, kind: input, shape index: {}]
  %s3 = inlined_call_operand.hbm [shape: f32[8,128], index: 3, kind: output, shape index: {}]
  %s4 = sld [smem:[#allocation0]]
  $region26: #{tpu_custom_call.1} parent=0
    _
  %s6 = ssub.s32 1, %s4
  %s7 = scalar_select 0, %s6, %s4
  $region1: #{tpu_custom_call.1} parent=0
    #allocation2 [shape = 'u8[65536]{0}', space=vmem, size = 0x10000, scoped, tag = 'input window, operand 1, single buffered']
    #allocation3 [shape = 's32[1]{0}', space=sflag, size = 0x4, scoped, tag = 'scoped memory for tpu_custom_call.1']
    #allocation4 [shape = 's32[1]{0}', space=sflag, size = 0x4, scoped, tag = 'scoped memory for tpu_custom_call.1']
    #allocation5 [shape = 'u8[4096]{0}', space=vmem, size = 0x1000, scoped, tag = 'output window, operand 0, single buffered']
    %8 = vsyncpa [#allocation3], 0
    %9 = vsyncpa [#allocation4], 0
    // Predicated region
    $region2: #{tpu_custom_call.1} parent=1 // pred_check
      _
    $region3: #{tpu_custom_call.1} parent=1 // pred_check_branch
      %11 = sbr.rel (0) target = $region5
    $region4: #{tpu_custom_call.1} parent=1 // pred_region
      _
    $region5: #{tpu_custom_call.1} parent=1 // pred_fallthru
      _
    // Predicated region
    $region6: #{tpu_custom_call.1} parent=1 // pred_check
      _
    $region7: #{tpu_custom_call.1} parent=1 // pred_check_branch
      %13 = sbr.rel (0) target = $region9
    $region8: #{tpu_custom_call.1} parent=1 // pred_region
      %s15 = ssub.s32 2048, 2048
      %16 = vsyncadd [#allocation3], %s15
      %s17 = sshll.u32 [#allocation2], 4
      %s18 = int_to_ptr.vmem [resolvable:$true] %s17
      %23 = dma.hbm_to_vmem [thread:$0]  %s1, 2048, %s18, [#allocation3], 128, 128, 8
    $region9: #{tpu_custom_call.1} parent=1 // pred_fallthru
      _
    // Predicated region
    $region10: #{tpu_custom_call.1} parent=1 // pred_check
      _
    $region11: #{tpu_custom_call.1} parent=1 // pred_check_branch
      %25 = sbr.rel (0) target = $region13
    $region12: #{tpu_custom_call.1} parent=1 // pred_region
      _
    $region13: #{tpu_custom_call.1} parent=1 // pred_fallthru
      _
    // Predicated region
    $region14: #{tpu_custom_call.1} parent=1 // pred_check
      _
    $region15: #{tpu_custom_call.1} parent=1 // pred_check_branch
      %27 = sbr.rel (0) target = $region17
    $region16: #{tpu_custom_call.1} parent=1 // pred_region
      %28 = dma.done [#allocation3], 2048
    $region17: #{tpu_custom_call.1} parent=1 // pred_fallthru
      _
    %v29 = vld [vmem:[%s0] sm:$0xff]
    %v30 = vld [vmem:[#allocation2] sm:$0xff]
    %v31 = vld [vmem:[#allocation2 + $0x8] sm:$0xff]
    %v32 = vld [vmem:[#allocation2 + $0x10] sm:$0xff]
    %v33 = vld [vmem:[#allocation2 + $0x18] sm:$0xff]
    %v34 = vld [vmem:[#allocation2 + $0x20] sm:$0xff]
    %v35 = vld [vmem:[#allocation2 + $0x28] sm:$0xff]
    %v36 = vld [vmem:[#allocation2 + $0x30] sm:$0xff]
    %v37 = vld [vmem:[#allocation2 + $0x38] sm:$0xff]
    %v38 = vld [vmem:[#allocation2 + $0x40] sm:$0xff]
    %v39 = vld [vmem:[#allocation2 + $0x48] sm:$0xff]
    %v40 = vld [vmem:[#allocation2 + $0x50] sm:$0xff]
    %v41 = vld [vmem:[#allocation2 + $0x58] sm:$0xff]
    %v42 = vld [vmem:[#allocation2 + $0x60] sm:$0xff]
    %v43 = vld [vmem:[#allocation2 + $0x68] sm:$0xff]
    %v44 = vld [vmem:[#allocation2 + $0x70] sm:$0xff]
    %v45 = vld [vmem:[#allocation2 + $0x78] sm:$0xff]
    %46 = vmatprep.subr.mxu0 0.0
    %47 = vmatpush1.xpose.msra.mxu0 %v30
    %48 = vmatprep.subr.mxu0 0.0
    %49 = vmatpush1.xpose.msra.mxu0 %v31
    %50 = vmatprep.subr.mxu0 0.0
    %51 = vmatpush1.xpose.msra.mxu0 %v32
    %52 = vmatprep.subr.mxu0 0.0
    %53 = vmatpush1.xpose.msra.mxu0 %v33
    %54 = vmatprep.subr.mxu0 0.0
    %55 = vmatpush1.xpose.msra.mxu0 %v34
    %56 = vmatprep.subr.mxu0 0.0
    %57 = vmatpush1.xpose.msra.mxu0 %v35
    %58 = vmatprep.subr.mxu0 0.0
    %59 = vmatpush1.xpose.msra.mxu0 %v36
    %60 = vmatprep.subr.mxu0 0.0
    %61 = vmatpush1.xpose.msra.mxu0 %v37
    %62 = vmatprep.subr.mxu0 0.0
    %63 = vmatpush1.xpose.msra.mxu0 %v38
    %64 = vmatprep.subr.mxu0 0.0
    %65 = vmatpush1.xpose.msra.mxu0 %v39
    %66 = vmatprep.subr.mxu0 0.0
    %67 = vmatpush1.xpose.msra.mxu0 %v40
    %68 = vmatprep.subr.mxu0 0.0
    %69 = vmatpush1.xpose.msra.mxu0 %v41
    %70 = vmatprep.subr.mxu0 0.0
    %71 = vmatpush1.xpose.msra.mxu0 %v42
    %72 = vmatprep.subr.mxu0 0.0
    %73 = vmatpush1.xpose.msra.mxu0 %v43
    %74 = vmatprep.subr.mxu0 0.0
    %75 = vmatpush1.xpose.msra.mxu0 %v44
    %76 = vmatprep.subr.mxu0 0.0
    %77 = vmatpush1.xpose.msra.mxu0 %v45
    %78 = vmatprep.subr.mxu0 0.0
    %79 = vmatpush1.xpose.msra.mxu0 0.0
    %80 = vmatprep.subr.mxu0 0.0
    %81 = vmatpush1.xpose.msra.mxu0 0.0
    %82 = vmatprep.subr.mxu0 0.0
    %83 = vmatpush1.xpose.msra.mxu0 0.0
    %84 = vmatprep.subr.mxu0 0.0
    %85 = vmatpush1.xpose.msra.mxu0 0.0
    %86 = vmatprep.subr.mxu0 0.0
    %87 = vmatpush1.xpose.msra.mxu0 0.0
    %88 = vmatprep.subr.mxu0 0.0
    %89 = vmatpush1.xpose.msra.mxu0 0.0
    %90 = vmatprep.subr.mxu0 0.0
    %91 = vmatpush1.xpose.msra.mxu0 0.0
    %92 = vmatprep.subr.mxu0 0.0
    %93 = vmatpush1.xpose.msra.mxu0 0.0
    %94 = vmatprep.subr.mxu0 0.0
    %95 = vmatpush1.xpose.msra.mxu0 0.0
    %96 = vmatprep.subr.mxu0 0.0
    %97 = vmatpush1.xpose.msra.mxu0 0.0
    %98 = vmatprep.subr.mxu0 0.0
    %99 = vmatpush1.xpose.msra.mxu0 0.0
    %100 = vmatprep.subr.mxu0 0.0
    %101 = vmatpush1.xpose.msra.mxu0 0.0
    %102 = vmatprep.subr.mxu0 0.0
    %103 = vmatpush1.xpose.msra.mxu0 0.0
    %104 = vmatprep.subr.mxu0 0.0
    %105 = vmatpush1.xpose.msra.mxu0 0.0
    %106 = vmatprep.subr.mxu0 0.0
    %107 = vmatpush1.xpose.msra.mxu0 0.0
    %108 = vmatprep.subr.mxu0 0.0
    %109 = vmatpush1.xpose.msra.mxu0 0.0
    %110 = vmatprep.mubr.f32.mxu0 0.0
    %111 = vmatmul.mubr.f32.gmra.mrb[0].mxu0 %v29
    %v112 = vpop.f32.mrb[0].mxu0
    %v113 = vadd.f32 0.0, %v112
    %v114 = vpop.f32.mrb[0].mxu0
    %115 = vdwg.mxu0
    %v116 = vmul.f32 %v30, %v30
    %v117 = vmul.f32 %v31, %v31
    %v118 = vmul.f32 %v32, %v32
    %v119 = vmul.f32 %v33, %v33
    %v120 = vmul.f32 %v34, %v34
    %v121 = vmul.f32 %v35, %v35
    %v122 = vmul.f32 %v36, %v36
    %v123 = vmul.f32 %v37, %v37
    %v124 = vmul.f32 %v38, %v38
    %v125 = vmul.f32 %v39, %v39
    %v126 = vmul.f32 %v40, %v40
    %v127 = vmul.f32 %v41, %v41
    %v128 = vmul.f32 %v42, %v42
    %v129 = vmul.f32 %v43, %v43
    %v130 = vmul.f32 %v44, %v44
    %v131 = vmul.f32 %v45, %v45
    %132 = vmatprep.subr.mxu0 0.0
    %133 = vmatpush1.xpose.msra.mxu0 %v116
    %134 = vmatprep.subr.mxu0 0.0
    %135 = vmatpush1.xpose.msra.mxu0 %v117
    %136 = vmatprep.subr.mxu0 0.0
    %137 = vmatpush1.xpose.msra.mxu0 %v118
    %138 = vmatprep.subr.mxu0 0.0
    %139 = vmatpush1.xpose.msra.mxu0 %v119
    %140 = vmatprep.subr.mxu0 0.0
    %141 = vmatpush1.xpose.msra.mxu0 %v120
    %142 = vmatprep.subr.mxu0 0.0
    %143 = vmatpush1.xpose.msra.mxu0 %v121
    %144 = vmatprep.subr.mxu0 0.0
    %145 = vmatpush1.xpose.msra.mxu0 %v122
    %146 = vmatprep.subr.mxu0 0.0
    %147 = vmatpush1.xpose.msra.mxu0 %v123
    %148 = vmatprep.subr.mxu0 0.0
    %149 = vmatpush1.xpose.msra.mxu0 %v124
    %150 = vmatprep.subr.mxu0 0.0
    %151 = vmatpush1.xpose.msra.mxu0 %v125
    %152 = vmatprep.subr.mxu0 0.0
    %153 = vmatpush1.xpose.msra.mxu0 %v126
    %154 = vmatprep.subr.mxu0 0.0
    %155 = vmatpush1.xpose.msra.mxu0 %v127
    %156 = vmatprep.subr.mxu0 0.0
    %157 = vmatpush1.xpose.msra.mxu0 %v128
    %158 = vmatprep.subr.mxu0 0.0
    %159 = vmatpush1.xpose.msra.mxu0 %v129
    %160 = vmatprep.subr.mxu0 0.0
    %161 = vmatpush1.xpose.msra.mxu0 %v130
    %162 = vmatprep.subr.mxu0 0.0
    %163 = vmatpush1.xpose.msra.mxu0 %v131
    %164 = vmatprep.subr.mxu0 0.0
    %165 = vmatpush1.xpose.msra.mxu0 0.0
    %166 = vmatprep.subr.mxu0 0.0
    %167 = vmatpush1.xpose.msra.mxu0 0.0
    %168 = vmatprep.subr.mxu0 0.0
    %169 = vmatpush1.xpose.msra.mxu0 0.0
    %170 = vmatprep.subr.mxu0 0.0
    %171 = vmatpush1.xpose.msra.mxu0 0.0
    %172 = vmatprep.subr.mxu0 0.0
    %173 = vmatpush1.xpose.msra.mxu0 0.0
    %174 = vmatprep.subr.mxu0 0.0
    %175 = vmatpush1.xpose.msra.mxu0 0.0
    %176 = vmatprep.subr.mxu0 0.0
    %177 = vmatpush1.xpose.msra.mxu0 0.0
    %178 = vmatprep.subr.mxu0 0.0
    %179 = vmatpush1.xpose.msra.mxu0 0.0
    %180 = vmatprep.subr.mxu0 0.0
    %181 = vmatpush1.xpose.msra.mxu0 0.0
    %182 = vmatprep.subr.mxu0 0.0
    %183 = vmatpush1.xpose.msra.mxu0 0.0
    %184 = vmatprep.subr.mxu0 0.0
    %185 = vmatpush1.xpose.msra.mxu0 0.0
    %186 = vmatprep.subr.mxu0 0.0
    %187 = vmatpush1.xpose.msra.mxu0 0.0
    %188 = vmatprep.subr.mxu0 0.0
    %189 = vmatpush1.xpose.msra.mxu0 0.0
    %190 = vmatprep.subr.mxu0 0.0
    %191 = vmatpush1.xpose.msra.mxu0 0.0
    %192 = vmatprep.subr.mxu0 0.0
    %193 = vmatpush1.xpose.msra.mxu0 0.0
    %194 = vmatprep.subr.mxu0 0.0
    %195 = vmatpush1.xpose.msra.mxu0 0.0
    %196 = vmatprep.mubr.f32.mxu0 0.0
    %197 = vmatmul.mubr.f32.gmra.mrb[0].mxu0 1.0
    %v198 = vpop.f32.mrb[0].mxu0
    %v199 = vadd.f32 0.0, %v198
    %v200 = vpop.f32.mrb[0].mxu0
    %201 = vdwg.mxu0
    %v202 = vmax.f32 %v199, 1e-24
    %v203 = vrsqrt.pop %v202
    %v204 = vmul.f32 %v113, %v203
    %v205 = vmax.f32 %v204, -0.9999999
    %v206 = vmin.f32 %v205, 0.9999999
    %v207 = vld [vmem:[%s2] sm:$0xff]
    %v208 = vlaneseq
    %v209 = vand.u32 %v208, 127
    %s210 = smul.u32 0, 128
    %v211 = vstv %s210
    %v212 = vadd.s32 %v209, %v211
    %213 = vset.pattern.permute.xlu0 0
    %214 = vperm.xlu0 %213, %v207
    %v215 = vpop.permute.xlu0 %214
    %vm216 = vcmp.eq.s32.totalorder %v212, %v215
    %v217 = vsub.f32 %v206, 0.35
    %v218 = vsel %vm216, %v217, %v206
    %v219 = vmul.f32 %v218, 6.498481
    %220 = vst [vmem:[#allocation5] sm:$0xff] %v219
    // Predicated region
    $region18: #{tpu_custom_call.1} parent=1 // pred_check
      _
    $region19: #{tpu_custom_call.1} parent=1 // pred_check_branch
      %222 = sbr.rel (0) target = $region21
    $region20: #{tpu_custom_call.1} parent=1 // pred_region
      %s224 = ssub.s32 128, 128
      %225 = vsyncadd [#allocation4], %s224
      %s227 = sshll.u32 [#allocation5], 4
      %s228 = int_to_ptr.vmem [resolvable:$true] %s227
      %230 = dma.vmem_to_hbm [thread:$0]  %s228, 128, %s3, [#allocation4]
    $region21: #{tpu_custom_call.1} parent=1 // pred_fallthru
      _
    // Predicated region
    $region22: #{tpu_custom_call.1} parent=1 // pred_check
      _
    $region23: #{tpu_custom_call.1} parent=1 // pred_check_branch
      %232 = sbr.rel (0) target = $region25
    $region24: #{tpu_custom_call.1} parent=1 // pred_region
      %233 = dma.done [#allocation4], 128
    $region25: #{tpu_custom_call.1} parent=1 // pred_fallthru
      _
    %234 = vsyncpa [#allocation3], 1
    %235 = vsyncpa [#allocation4], 1

</llo_original>
